<compile_context>
chip_gen: v7x
topology: tpu7x:2x2x1
jax: 0.10.0
libtpu: 0.0.40
codegen_flags: <defaults>
</compile_context>

<pallas_src>
import jax
import jax.numpy as jnp
from jax.experimental import pallas as pl
from jax.experimental.pallas import tpu as pltpu


def _round_up(x, m):
    return (x + m - 1) // m * m


def _ffn_kernel(x_ref, w1_ref, b1_ref, w2_ref, b2_ref, o_ref):
    # x_ref : [TM, D_in]     w1_ref: [D_in, Hp]   b1_ref: [1, Hp]
    # w2_ref: [Hp, Cp]       b2_ref: [1, Cp]      o_ref : [TM, Cp]
    h = jnp.dot(x_ref[...], w1_ref[...], preferred_element_type=jnp.float32)
    h = jnp.maximum(h + b1_ref[...], 0.0)
    # Eval-mode dropout == identity (see TODO at top of file).
    out = jnp.dot(h.astype(w2_ref.dtype), w2_ref[...],
                  preferred_element_type=jnp.float32)
    o_ref[...] = (out + b2_ref[...]).astype(o_ref.dtype)


def feed_forward_network(x, w1, b1, w2, b2, *, tile_m=None,
                         vmem_budget_bytes=40 * 1024 * 1024):
    """Eval-mode FeedForwardNetwork forward.

    x : [..., D_in]
    w1: [D_in, H],  b1: [H]
    w2: [H, D_out], b2: [D_out]
    returns [..., D_out]
    """
    orig_shape = x.shape
    d_in = orig_shape[-1]
    M = 1
    for d in orig_shape[:-1]:
        M *= d

    hdim = w1.shape[1]
    cdim = w2.shape[1]
    h_pad = _round_up(hdim, 128)
    c_pad = _round_up(cdim, 128)

    # Zero-pad parameters to lane-aligned widths. Padded hidden units compute
    # relu(0 + 0) = 0 and feed zero rows of w2; padded output columns are
    # 0 + 0 and are sliced off below. Pure layout plumbing, no math change.
    w1p = jnp.pad(w1, ((0, 0), (0, h_pad - hdim)))
    b1p = jnp.pad(b1, (0, h_pad - hdim)).reshape(1, h_pad)
    w2p = jnp.pad(w2, ((0, h_pad - hdim), (0, c_pad - cdim)))
    b2p = jnp.pad(b2, (0, c_pad - cdim)).reshape(1, c_pad)

    x2 = x.reshape(M, d_in)
    x_bytes = jnp.dtype(x2.dtype).itemsize
    w_bytes = jnp.dtype(w1p.dtype).itemsize
    out_bytes = x_bytes

    # --- choose TILE_M from a conservative VMEM budget (safe on v7x's 64 MiB)
    if tile_m is None:
        resident = (d_in * h_pad + h_pad * c_pad) * w_bytes + (h_pad + c_pad) * w_bytes
        per_row = (2 * d_in * x_bytes          # double-buffered x tile
                   + 2 * c_pad * out_bytes     # double-buffered out tile
                   + (h_pad + c_pad) * 4)      # f32 intermediate / accumulator
        avail = max(vmem_budget_bytes - resident, per_row * 8)
        tile_m = min(512, max(8, (avail // per_row) // 8 * 8))
    tile_m = max(8, (tile_m // 8) * 8)
    tile_m = min(tile_m, _round_up(M, 8))

    m_pad = _round_up(M, tile_m)
    if m_pad != M:
        x2 = jnp.pad(x2, ((0, m_pad - M), (0, 0)))

    grid = (m_pad // tile_m,)

    flops = 2 * m_pad * d_in * h_pad + 2 * m_pad * h_pad * c_pad
    bytes_accessed = (m_pad * d_in * x_bytes
                      + d_in * h_pad * w_bytes
                      + h_pad * c_pad * w_bytes
                      + (h_pad + c_pad) * w_bytes
                      + m_pad * c_pad * out_bytes)
    cost = pl.CostEstimate(flops=flops, transcendentals=0,
                           bytes_accessed=bytes_accessed)

    out = pl.pallas_call(
        _ffn_kernel,
        out_shape=jax.ShapeDtypeStruct((m_pad, c_pad), x2.dtype),
        grid_spec=pltpu.PrefetchScalarGridSpec(
            num_scalar_prefetch=0,
            grid=grid,
            in_specs=[
                pl.BlockSpec((tile_m, d_in), lambda i: (i, 0)),   # x tile
                pl.BlockSpec((d_in, h_pad), lambda i: (0, 0)),    # w1 resident
                pl.BlockSpec((1, h_pad), lambda i: (0, 0)),       # b1 resident
                pl.BlockSpec((h_pad, c_pad), lambda i: (0, 0)),   # w2 resident
                pl.BlockSpec((1, c_pad), lambda i: (0, 0)),       # b2 resident
            ],
            out_specs=pl.BlockSpec((tile_m, c_pad), lambda i: (i, 0)),
        ),
        compiler_params=pltpu.CompilerParams(
            dimension_semantics=("parallel",),          # shard tiles across TCs
            vmem_limit_bytes=64 * 1024 * 1024,
        ),
        cost_estimate=cost,
    )(x2, w1p, b1p, w2p, b2p)

    out = out[:M, :cdim]
    return out.reshape(*orig_shape[:-1], cdim)


if __name__ == "__main__":
    # Small shapes consistent with the module's forward.
    batch, seq, input_size, hidden_size, output_size = 2, 8, 32, 64, 8

    key = jax.random.PRNGKey(0)
    k_x, k_w1, k_b1, k_w2, k_b2 = jax.random.split(key, 5)

    x = jax.random.normal(k_x, (batch, seq, input_size), dtype=jnp.float32)
    # nn.Linear stores weight as [out, in]; we keep the [in, out] layout for x @ W.
    w1 = jax.random.normal(k_w1, (input_size, hidden_size), dtype=jnp.float32) * 0.05
    b1 = jax.random.normal(k_b1, (hidden_size,), dtype=jnp.float32) * 0.05
    w2 = jax.random.normal(k_w2, (hidden_size, output_size), dtype=jnp.float32) * 0.05
    b2 = jax.random.normal(k_b2, (output_size,), dtype=jnp.float32) * 0.05

    out = feed_forward_network(x, w1, b1, w2, b2)
    jax.block_until_ready(out)

    # Reference: eval-mode forward (dropout = identity).
    ref = jnp.maximum(x @ w1 + b1, 0.0) @ w2 + b2
    assert out.shape == (batch, seq, output_size), out.shape
    assert jnp.allclose(out, ref, atol=1e-5, rtol=1e-5)

    print("KERNEL_OK")
</pallas_src>

<mosaic_0001>
module attributes {stable_mosaic.version = 11 : i64} {
  func.func @_ffn_kernel(%arg0: i32, %arg1: memref<16x32xf32, #tpu.memory_space<vmem>>, %arg2: memref<32x128xf32, #tpu.memory_space<vmem>>, %arg3: memref<1x128xf32, #tpu.memory_space<vmem>>, %arg4: memref<128x128xf32, #tpu.memory_space<vmem>>, %arg5: memref<1x128xf32, #tpu.memory_space<vmem>>, %arg6: memref<16x128xf32, #tpu.memory_space<vmem>>) attributes {dimension_semantics = [#tpu.dimension_semantics<parallel>], iteration_bounds = array<i64: 1>, scalar_prefetch = 0 : i64, scratch_operands = 0 : i64, tpu.core_type = #tpu.core_type<tc>, window_params = [{transform_indices = @transform_0, window_bounds = array<i64: 16, 32>}, {pipeline_mode = #tpu.pipeline_mode<synchronous>, transform_indices = @transform_1, window_bounds = array<i64: 32, 128>}, {pipeline_mode = #tpu.pipeline_mode<synchronous>, transform_indices = @transform_2, window_bounds = array<i64: 1, 128>}, {pipeline_mode = #tpu.pipeline_mode<synchronous>, transform_indices = @transform_3, window_bounds = array<i64: 128, 128>}, {pipeline_mode = #tpu.pipeline_mode<synchronous>, transform_indices = @transform_4, window_bounds = array<i64: 1, 128>}, {transform_indices = @transform_5, window_bounds = array<i64: 16, 128>}]} {
    %c0 = arith.constant 0 : index
    %c0_0 = arith.constant 0 : index
    %0 = vector.load %arg1[%c0, %c0_0] : memref<16x32xf32, #tpu.memory_space<vmem>>, vector<16x32xf32>
    %c0_1 = arith.constant 0 : index
    %c0_2 = arith.constant 0 : index
    %1 = vector.load %arg2[%c0_1, %c0_2] : memref<32x128xf32, #tpu.memory_space<vmem>>, vector<32x128xf32>
    %cst = arith.constant dense<0.000000e+00> : vector<16x128xf32>
    %2 = tpu.matmul %0, %1, %cst {dimension_numbers = #tpu.dot_dimension_numbers<[1], [0], [0], [1], [0, 0, 1, 1], [], []>} : vector<16x32xf32>, vector<32x128xf32>, vector<16x128xf32> -> vector<16x128xf32>
    %c0_3 = arith.constant 0 : index
    %c0_4 = arith.constant 0 : index
    %3 = vector.load %arg3[%c0_3, %c0_4] : memref<1x128xf32, #tpu.memory_space<vmem>>, vector<1x128xf32>
    %4 = vector.broadcast %3 : vector<1x128xf32> to vector<16x128xf32>
    %5 = arith.addf %2, %4 : vector<16x128xf32>
    %cst_5 = arith.constant 0.000000e+00 : f32
    %6 = vector.broadcast %cst_5 : f32 to vector<16x128xf32>
    %7 = arith.maximumf %5, %6 : vector<16x128xf32>
    %c0_6 = arith.constant 0 : index
    %c0_7 = arith.constant 0 : index
    %8 = vector.load %arg4[%c0_6, %c0_7] : memref<128x128xf32, #tpu.memory_space<vmem>>, vector<128x128xf32>
    %cst_8 = arith.constant dense<0.000000e+00> : vector<16x128xf32>
    %9 = tpu.matmul %7, %8, %cst_8 {dimension_numbers = #tpu.dot_dimension_numbers<[1], [0], [0], [1], [0, 0, 1, 1], [], []>} : vector<16x128xf32>, vector<128x128xf32>, vector<16x128xf32> -> vector<16x128xf32>
    %c0_9 = arith.constant 0 : index
    %c0_10 = arith.constant 0 : index
    %10 = vector.load %arg5[%c0_9, %c0_10] : memref<1x128xf32, #tpu.memory_space<vmem>>, vector<1x128xf32>
    %11 = vector.broadcast %10 : vector<1x128xf32> to vector<16x128xf32>
    %12 = arith.addf %9, %11 : vector<16x128xf32>
    %c0_11 = arith.constant 0 : index
    %c0_12 = arith.constant 0 : index
    %13 = vector.load %arg6[%c0_11, %c0_12] : memref<16x128xf32, #tpu.memory_space<vmem>>, vector<16x128xf32>
    tpu.vector_store %arg6[%c0_11, %c0_12], %12 {strides = array<i32>} : memref<16x128xf32, #tpu.memory_space<vmem>>, vector<16x128xf32>,
    return
  }
  func.func @transform_0(%arg0: i32) -> (i32, i32) {
    %c0_i32 = arith.constant 0 : i32
    %c0_i32_0 = arith.constant 0 : i32
    return %arg0, %c0_i32 : i32, i32
  }
  func.func @transform_1(%arg0: i32) -> (i32, i32) {
    %c0_i32 = arith.constant 0 : i32
    %c0_i32_0 = arith.constant 0 : i32
    %c0_i32_1 = arith.constant 0 : i32
    return %c0_i32, %c0_i32_0 : i32, i32
  }
  func.func @transform_2(%arg0: i32) -> (i32, i32) {
    %c0_i32 = arith.constant 0 : i32
    %c0_i32_0 = arith.constant 0 : i32
    %c0_i32_1 = arith.constant 0 : i32
    return %c0_i32, %c0_i32_0 : i32, i32
  }
  func.func @transform_3(%arg0: i32) -> (i32, i32) {
    %c0_i32 = arith.constant 0 : i32
    %c0_i32_0 = arith.constant 0 : i32
    %c0_i32_1 = arith.constant 0 : i32
    return %c0_i32, %c0_i32_0 : i32, i32
  }
  func.func @transform_4(%arg0: i32) -> (i32, i32) {
    %c0_i32 = arith.constant 0 : i32
    %c0_i32_0 = arith.constant 0 : i32
    %c0_i32_1 = arith.constant 0 : i32
    return %c0_i32, %c0_i32_0 : i32, i32
  }
  func.func @transform_5(%arg0: i32) -> (i32, i32) {
    %c0_i32 = arith.constant 0 : i32
    %c0_i32_0 = arith.constant 0 : i32
    return %arg0, %c0_i32 : i32, i32
  }
}

</mosaic_0001>

<llo_original>
// kernel: tpu_custom_call.1
$region0: #{tpu_custom_call.1}
  #allocation0 [shape = 'u32[]', space=smem, size = 0x4, offset = 0x4, fixed_abs, tag = 'smem constant byte address 0x4 - core index']
  #allocation1 [shape = 'u32[144,128]{1,0:T(1,128)}', space=vmem, size = 0x12000, scoped, tag = 'internal scratch']
  %s0 = inlined_call_operand.hbm [shape: f32[16,32], index: 0, kind: input, shape index: {}]
  %s1 = inlined_call_operand.hbm [shape: f32[32,128], index: 1, kind: input, shape index: {}]
  %s2 = inlined_call_operand.hbm [shape: f32[1,128], index: 2, kind: input, shape index: {}]
  %s3 = inlined_call_operand.hbm [shape: f32[128,128], index: 3, kind: input, shape index: {}]
  %s4 = inlined_call_operand.hbm [shape: f32[1,128], index: 4, kind: input, shape index: {}]
  %s5 = inlined_call_operand.hbm [shape: f32[16,128], index: 5, kind: output, shape index: {}]
  %s6 = sld [smem:[#allocation0]]
  $region50: #{tpu_custom_call.1} parent=0
    _
  %s8 = ssub.s32 1, %s6
  %s9 = scalar_select 0, %s8, %s6
  $region1: #{tpu_custom_call.1} parent=0
    #allocation2 [shape = 'u8[8192]{0}', space=vmem, size = 0x2000, scoped, tag = 'input window, operand 0, single buffered']
    #allocation3 [shape = 's32[1]{0}', space=sflag, size = 0x4, scoped, tag = 'scoped memory for tpu_custom_call.1']
    #allocation4 [shape = 's32[1]{0}', space=sflag, size = 0x4, scoped, tag = 'scoped memory for tpu_custom_call.1']
    #allocation5 [shape = 'u8[16384]{0}', space=vmem, size = 0x4000, scoped, tag = 'input window, operand 1, single buffered']
    #allocation6 [shape = 's32[1]{0}', space=sflag, size = 0x4, scoped, tag = 'scoped memory for tpu_custom_call.1']
    #allocation7 [shape = 'u8[512]{0}', space=vmem, size = 0x400, scoped, tag = 'input window, operand 2, single buffered']
    #allocation8 [shape = 'u8[65536]{0}', space=vmem, size = 0x10000, scoped, tag = 'input window, operand 3, single buffered']
    #allocation9 [shape = 's32[1]{0}', space=sflag, size = 0x4, scoped, tag = 'scoped memory for tpu_custom_call.1']
    #allocation10 [shape = 'u8[512]{0}', space=vmem, size = 0x400, scoped, tag = 'input window, operand 4, single buffered']
    #allocation11 [shape = 'u8[8192]{0}', space=vmem, size = 0x2000, scoped, tag = 'output window, operand 0, single buffered']
    %10 = vsyncpa [#allocation3], 0
    %11 = vsyncpa [#allocation6], 0
    %12 = vsyncpa [#allocation9], 0
    %13 = vsyncpa [#allocation4], 0
    // Predicated region
    $region2: #{tpu_custom_call.1} parent=1 // pred_check
      _
    $region3: #{tpu_custom_call.1} parent=1 // pred_check_branch
      %15 = sbr.rel (0) target = $region5
    $region4: #{tpu_custom_call.1} parent=1 // pred_region
      %s17 = ssub.s32 256, 256
      %18 = vsyncadd [#allocation3], %s17
      %s19 = sshll.u32 [#allocation2], 4
      %s20 = int_to_ptr.vmem [resolvable:$true] %s19
      %25 = dma.hbm_to_vmem [thread:$0]  %s0, 256, %s20, [#allocation3], 128, 128, 8
    $region5: #{tpu_custom_call.1} parent=1 // pred_fallthru
      _
    // Predicated region
    $region6: #{tpu_custom_call.1} parent=1 // pred_check
      _
    $region7: #{tpu_custom_call.1} parent=1 // pred_check_branch
      %27 = sbr.rel (0) target = $region9
    $region8: #{tpu_custom_call.1} parent=1 // pred_region
      %s29 = ssub.s32 512, 512
      %30 = vsyncadd [#allocation6], %s29
      %s31 = sshll.u32 [#allocation5], 4
      %s32 = int_to_ptr.vmem [resolvable:$true] %s31
      %37 = dma.hbm_to_vmem [thread:$0]  %s1, 512, %s32, [#allocation6], 128, 128, 8
    $region9: #{tpu_custom_call.1} parent=1 // pred_fallthru
      _
    // Predicated region
    $region10: #{tpu_custom_call.1} parent=1 // pred_check
      _
    $region11: #{tpu_custom_call.1} parent=1 // pred_check_branch
      %39 = sbr.rel (0) target = $region13
    $region12: #{tpu_custom_call.1} parent=1 // pred_region
      %s41 = ssub.s32 16, 16
      %42 = vsyncadd [#allocation6], %s41
      %s44 = sshll.u32 [#allocation7], 4
      %s45 = int_to_ptr.vmem [resolvable:$true] %s44
      %47 = dma.hbm_to_vmem [thread:$0]  %s2, 16, %s45, [#allocation6]
    $region13: #{tpu_custom_call.1} parent=1 // pred_fallthru
      _
    // Predicated region
    $region14: #{tpu_custom_call.1} parent=1 // pred_check
      _
    $region15: #{tpu_custom_call.1} parent=1 // pred_check_branch
      %49 = sbr.rel (0) target = $region17
    $region16: #{tpu_custom_call.1} parent=1 // pred_region
      %s51 = ssub.s32 2048, 2048
      %52 = vsyncadd [#allocation9], %s51
      %s53 = sshll.u32 [#allocation8], 4
      %s54 = int_to_ptr.vmem [resolvable:$true] %s53
      %59 = dma.hbm_to_vmem [thread:$0]  %s3, 2048, %s54, [#allocation9], 128, 128, 8
    $region17: #{tpu_custom_call.1} parent=1 // pred_fallthru
      _
    // Predicated region
    $region18: #{tpu_custom_call.1} parent=1 // pred_check
      _
    $region19: #{tpu_custom_call.1} parent=1 // pred_check_branch
      %61 = sbr.rel (0) target = $region21
    $region20: #{tpu_custom_call.1} parent=1 // pred_region
      %s63 = ssub.s32 16, 16
      %64 = vsyncadd [#allocation9], %s63
      %s66 = sshll.u32 [#allocation10], 4
      %s67 = int_to_ptr.vmem [resolvable:$true] %s66
      %69 = dma.hbm_to_vmem [thread:$0]  %s4, 16, %s67, [#allocation9]
    $region21: #{tpu_custom_call.1} parent=1 // pred_fallthru
      _
    // Predicated region
    $region22: #{tpu_custom_call.1} parent=1 // pred_check
      _
    $region23: #{tpu_custom_call.1} parent=1 // pred_check_branch
      %71 = sbr.rel (0) target = $region25
    $region24: #{tpu_custom_call.1} parent=1 // pred_region
      %72 = dma.done [#allocation3], 256
    $region25: #{tpu_custom_call.1} parent=1 // pred_fallthru
      _
    // Predicated region
    $region26: #{tpu_custom_call.1} parent=1 // pred_check
      _
    $region27: #{tpu_custom_call.1} parent=1 // pred_check_branch
      %74 = sbr.rel (0) target = $region29
    $region28: #{tpu_custom_call.1} parent=1 // pred_region
      %75 = dma.done [#allocation6], 512
    $region29: #{tpu_custom_call.1} parent=1 // pred_fallthru
      _
    // Predicated region
    $region30: #{tpu_custom_call.1} parent=1 // pred_check
      _
    $region31: #{tpu_custom_call.1} parent=1 // pred_check_branch
      %77 = sbr.rel (0) target = $region33
    $region32: #{tpu_custom_call.1} parent=1 // pred_region
      %78 = dma.done [#allocation6], 16
    $region33: #{tpu_custom_call.1} parent=1 // pred_fallthru
      _
    // Predicated region
    $region34: #{tpu_custom_call.1} parent=1 // pred_check
      _
    $region35: #{tpu_custom_call.1} parent=1 // pred_check_branch
      %80 = sbr.rel (0) target = $region37
    $region36: #{tpu_custom_call.1} parent=1 // pred_region
      %81 = dma.done [#allocation9], 2048
    $region37: #{tpu_custom_call.1} parent=1 // pred_fallthru
      _
    // Predicated region
    $region38: #{tpu_custom_call.1} parent=1 // pred_check
      _
    $region39: #{tpu_custom_call.1} parent=1 // pred_check_branch
      %83 = sbr.rel (0) target = $region41
    $region40: #{tpu_custom_call.1} parent=1 // pred_region
      %84 = dma.done [#allocation9], 16
    $region41: #{tpu_custom_call.1} parent=1 // pred_fallthru
      _
    %v85 = vld [vmem:[#allocation2] sm:$0xff]
    %v86 = vld [vmem:[#allocation2 + $0x8] sm:$0xff]
    %v87 = vld [vmem:[#allocation5] sm:$0xff]
    %v88 = vld [vmem:[#allocation5 + $0x8] sm:$0xff]
    %v89 = vld [vmem:[#allocation5 + $0x10] sm:$0xff]
    %v90 = vld [vmem:[#allocation5 + $0x18] sm:$0xff]
    %v91 = vld [vmem:[#allocation7] sm:$0x1]
    %v93 = vlaneseq
    %v94 = vshrl.u32 %v93, 7
    %v95 = vsub.s32 0, %v94
    %v96 = vrot.slane %v91, %v95
    %vm98 = vcmask 261120
    %v100 = vsel %vm98, %v85, 0
    %v103 = vsel %vm98, %v86, 0
    %105 = vmatprep.subr.mxu0 0.0
    %106 = vmatpush1.msra.mxu0 %v87
    %107 = vmatprep.subr.mxu0 0.0
    %108 = vmatpush1.msra.mxu0 %v88
    %109 = vmatprep.subr.mxu0 0.0
    %110 = vmatpush1.msra.mxu0 %v89
    %111 = vmatprep.subr.mxu0 0.0
    %112 = vmatpush1.msra.mxu0 %v90
    %113 = vmatprep.subr.mxu0 0.0
    %114 = vmatpush1.msra.mxu0 0.0
    %115 = vmatprep.subr.mxu0 0.0
    %116 = vmatpush1.msra.mxu0 0.0
    %117 = vmatprep.subr.mxu0 0.0
    %118 = vmatpush1.msra.mxu0 0.0
    %119 = vmatprep.subr.mxu0 0.0
    %120 = vmatpush1.msra.mxu0 0.0
    %121 = vmatprep.subr.mxu0 0.0
    %122 = vmatpush1.msra.mxu0 0.0
    %123 = vmatprep.subr.mxu0 0.0
    %124 = vmatpush1.msra.mxu0 0.0
    %125 = vmatprep.subr.mxu0 0.0
    %126 = vmatpush1.msra.mxu0 0.0
    %127 = vmatprep.subr.mxu0 0.0
    %128 = vmatpush1.msra.mxu0 0.0
    %129 = vmatprep.subr.mxu0 0.0
    %130 = vmatpush1.msra.mxu0 0.0
    %131 = vmatprep.subr.mxu0 0.0
    %132 = vmatpush1.msra.mxu0 0.0
    %133 = vmatprep.subr.mxu0 0.0
    %134 = vmatpush1.msra.mxu0 0.0
    %135 = vmatprep.subr.mxu0 0.0
    %136 = vmatpush1.msra.mxu0 0.0
    %137 = vmatprep.subr.mxu0 0.0
    %138 = vmatpush1.msra.mxu0 0.0
    %139 = vmatprep.subr.mxu0 0.0
    %140 = vmatpush1.msra.mxu0 0.0
    %141 = vmatprep.subr.mxu0 0.0
    %142 = vmatpush1.msra.mxu0 0.0
    %143 = vmatprep.subr.mxu0 0.0
    %144 = vmatpush1.msra.mxu0 0.0
    %145 = vmatprep.subr.mxu0 0.0
    %146 = vmatpush1.msra.mxu0 0.0
    %147 = vmatprep.subr.mxu0 0.0
    %148 = vmatpush1.msra.mxu0 0.0
    %149 = vmatprep.subr.mxu0 0.0
    %150 = vmatpush1.msra.mxu0 0.0
    %151 = vmatprep.subr.mxu0 0.0
    %152 = vmatpush1.msra.mxu0 0.0
    %153 = vmatprep.subr.mxu0 0.0
    %154 = vmatpush1.msra.mxu0 0.0
    %155 = vmatprep.subr.mxu0 0.0
    %156 = vmatpush1.msra.mxu0 0.0
    %157 = vmatprep.subr.mxu0 0.0
    %158 = vmatpush1.msra.mxu0 0.0
    %159 = vmatprep.subr.mxu0 0.0
    %160 = vmatpush1.msra.mxu0 0.0
    %161 = vmatprep.subr.mxu0 0.0
    %162 = vmatpush1.msra.mxu0 0.0
    %163 = vmatprep.subr.mxu0 0.0
    %164 = vmatpush1.msra.mxu0 0.0
    %165 = vmatprep.subr.mxu0 0.0
    %166 = vmatpush1.msra.mxu0 0.0
    %167 = vmatprep.subr.mxu0 0.0
    %168 = vmatpush1.msra.mxu0 0.0
    %169 = vmatprep.mubr.f32.mxu0 0.0
    %170 = vmatmul.mubr.f32.gmra.mrb[0].mxu0 %v100
    %v171 = vpop.f32.mrb[0].mxu0
    %v172 = vadd.f32 %v96, %v171
    %v173 = vpop.f32.mrb[0].mxu0
    %174 = vmatprep.mubr.f32.mxu0 0.0
    %175 = vmatmul.mubr.f32.gmra.mrb[0].mxu0 %v103
    %v176 = vpop.f32.mrb[0].mxu0
    %v177 = vadd.f32 %v96, %v176
    %v178 = vpop.f32.mrb[0].mxu0
    %179 = vdwg.mxu0
    %v180 = vmax.f32 %v172, 0.0
    %v181 = vmax.f32 %v177, 0.0
    %v182 = vld [vmem:[#allocation8] sm:$0xff]
    %v183 = vld [vmem:[#allocation8 + $0x8] sm:$0xff]
    %v184 = vld [vmem:[#allocation8 + $0x10] sm:$0xff]
    %v185 = vld [vmem:[#allocation8 + $0x18] sm:$0xff]
    %v186 = vld [vmem:[#allocation8 + $0x20] sm:$0xff]
    %v187 = vld [vmem:[#allocation8 + $0x28] sm:$0xff]
    %v188 = vld [vmem:[#allocation8 + $0x30] sm:$0xff]
    %v189 = vld [vmem:[#allocation8 + $0x38] sm:$0xff]
    %v190 = vld [vmem:[#allocation8 + $0x40] sm:$0xff]
    %v191 = vld [vmem:[#allocation8 + $0x48] sm:$0xff]
    %v192 = vld [vmem:[#allocation8 + $0x50] sm:$0xff]
    %v193 = vld [vmem:[#allocation8 + $0x58] sm:$0xff]
    %v194 = vld [vmem:[#allocation8 + $0x60] sm:$0xff]
    %v195 = vld [vmem:[#allocation8 + $0x68] sm:$0xff]
    %v196 = vld [vmem:[#allocation8 + $0x70] sm:$0xff]
    %v197 = vld [vmem:[#allocation8 + $0x78] sm:$0xff]
    %v198 = vld [vmem:[#allocation10] sm:$0x1]
    %v200 = vlaneseq
    %v201 = vshrl.u32 %v200, 7
    %v202 = vsub.s32 0, %v201
    %v203 = vrot.slane %v198, %v202
    %205 = vmatprep.subr.mxu0 0.0
    %206 = vmatpush1.msra.mxu0 %v182
    %207 = vmatprep.subr.mxu0 0.0
    %208 = vmatpush1.msra.mxu0 %v183
    %209 = vmatprep.subr.mxu0 0.0
    %210 = vmatpush1.msra.mxu0 %v184
    %211 = vmatprep.subr.mxu0 0.0
    %212 = vmatpush1.msra.mxu0 %v185
    %213 = vmatprep.subr.mxu0 0.0
    %214 = vmatpush1.msra.mxu0 %v186
    %215 = vmatprep.subr.mxu0 0.0
    %216 = vmatpush1.msra.mxu0 %v187
    %217 = vmatprep.subr.mxu0 0.0
    %218 = vmatpush1.msra.mxu0 %v188
    %219 = vmatprep.subr.mxu0 0.0
    %220 = vmatpush1.msra.mxu0 %v189
    %221 = vmatprep.subr.mxu0 0.0
    %222 = vmatpush1.msra.mxu0 %v190
    %223 = vmatprep.subr.mxu0 0.0
    %224 = vmatpush1.msra.mxu0 %v191
    %225 = vmatprep.subr.mxu0 0.0
    %226 = vmatpush1.msra.mxu0 %v192
    %227 = vmatprep.subr.mxu0 0.0
    %228 = vmatpush1.msra.mxu0 %v193
    %229 = vmatprep.subr.mxu0 0.0
    %230 = vmatpush1.msra.mxu0 %v194
    %231 = vmatprep.subr.mxu0 0.0
    %232 = vmatpush1.msra.mxu0 %v195
    %233 = vmatprep.subr.mxu0 0.0
    %234 = vmatpush1.msra.mxu0 %v196
    %235 = vmatprep.subr.mxu0 0.0
    %236 = vmatpush1.msra.mxu0 %v197
    %237 = vmatprep.subr.mxu0 0.0
    %238 = vmatpush1.msra.mxu0 0.0
    %239 = vmatprep.subr.mxu0 0.0
    %240 = vmatpush1.msra.mxu0 0.0
    %241 = vmatprep.subr.mxu0 0.0
    %242 = vmatpush1.msra.mxu0 0.0
    %243 = vmatprep.subr.mxu0 0.0
    %244 = vmatpush1.msra.mxu0 0.0
    %245 = vmatprep.subr.mxu0 0.0
    %246 = vmatpush1.msra.mxu0 0.0
    %247 = vmatprep.subr.mxu0 0.0
    %248 = vmatpush1.msra.mxu0 0.0
    %249 = vmatprep.subr.mxu0 0.0
    %250 = vmatpush1.msra.mxu0 0.0
    %251 = vmatprep.subr.mxu0 0.0
    %252 = vmatpush1.msra.mxu0 0.0
    %253 = vmatprep.subr.mxu0 0.0
    %254 = vmatpush1.msra.mxu0 0.0
    %255 = vmatprep.subr.mxu0 0.0
    %256 = vmatpush1.msra.mxu0 0.0
    %257 = vmatprep.subr.mxu0 0.0
    %258 = vmatpush1.msra.mxu0 0.0
    %259 = vmatprep.subr.mxu0 0.0
    %260 = vmatpush1.msra.mxu0 0.0
    %261 = vmatprep.subr.mxu0 0.0
    %262 = vmatpush1.msra.mxu0 0.0
    %263 = vmatprep.subr.mxu0 0.0
    %264 = vmatpush1.msra.mxu0 0.0
    %265 = vmatprep.subr.mxu0 0.0
    %266 = vmatpush1.msra.mxu0 0.0
    %267 = vmatprep.subr.mxu0 0.0
    %268 = vmatpush1.msra.mxu0 0.0
    %269 = vmatprep.mubr.f32.mxu0 0.0
    %270 = vmatmul.mubr.f32.gmra.mrb[0].mxu0 %v180
    %v271 = vpop.f32.mrb[0].mxu0
    %v272 = vadd.f32 %v203, %v271
    %v273 = vpop.f32.mrb[0].mxu0
    %274 = vmatprep.mubr.f32.mxu0 0.0
    %275 = vmatmul.mubr.f32.gmra.mrb[0].mxu0 %v181
    %v276 = vpop.f32.mrb[0].mxu0
    %v277 = vadd.f32 %v203, %v276
    %v278 = vpop.f32.mrb[0].mxu0
    %279 = vdwg.mxu0
    %280 = vst [vmem:[#allocation11] sm:$0xff] %v272
    %281 = vst [vmem:[#allocation11 + $0x8] sm:$0xff] %v277
    // Predicated region
    $region42: #{tpu_custom_call.1} parent=1 // pred_check
      _
    $region43: #{tpu_custom_call.1} parent=1 // pred_check_branch
      %283 = sbr.rel (0) target = $region45
    $region44: #{tpu_custom_call.1} parent=1 // pred_region
      %s285 = ssub.s32 256, 256
      %286 = vsyncadd [#allocation4], %s285
      %s287 = sshll.u32 [#allocation11], 4
      %s288 = int_to_ptr.vmem [resolvable:$true] %s287
      %293 = dma.vmem_to_hbm [thread:$0]  %s288, 256, %s5, [#allocation4], 128, 128, 8
    $region45: #{tpu_custom_call.1} parent=1 // pred_fallthru
      _
    // Predicated region
    $region46: #{tpu_custom_call.1} parent=1 // pred_check
      _
    $region47: #{tpu_custom_call.1} parent=1 // pred_check_branch
      %295 = sbr.rel (0) target = $region49
    $region48: #{tpu_custom_call.1} parent=1 // pred_region
      %296 = dma.done [#allocation4], 256
    $region49: #{tpu_custom_call.1} parent=1 // pred_fallthru
      _
    %297 = vsyncpa [#allocation3], 1
    %298 = vsyncpa [#allocation6], 1
    %299 = vsyncpa [#allocation9], 1
    %300 = vsyncpa [#allocation4], 1

</llo_original>
